<compile_context>
chip_gen: v7x
topology: tpu7x:2x2x1
jax: 0.10.0
libtpu: 0.0.40
codegen_flags: <defaults>
</compile_context>

<pallas_src>
import functools
import math

import jax
import jax.numpy as jnp
from jax import lax
from jax.experimental import pallas as pl
from jax.experimental.pallas import tpu as pltpu


def _round_up(x, m):
    return ((x + m - 1) // m) * m


def _l2_normalize(v, eps=1e-12):
    """F.normalize(p=2, dim=-1): v / max(||v||, eps) == v * rsqrt(max(||v||^2, eps^2))."""
    v = v.astype(jnp.float32)
    ssq = jnp.sum(v * v, axis=-1, keepdims=True)
    return v * lax.rsqrt(jnp.maximum(ssq, jnp.float32(eps * eps)))


def _tensorcores_per_chip():
    """Best-effort detection of multi-TensorCore chips (v7x has 2 TCs/chip)."""
    try:
        kind = jax.devices()[0].device_kind.lower()
    except Exception:
        return 1
    return 2 if ("v7" in kind or "tpu7" in kind) else 1


def _proxy_nca_kernel(
    xn_ref,     # [TB, Dp]  normalized embeddings (matmul dtype), resident over class axis
    pT_ref,     # [Dp, TC]  normalized, transposed proxy tile (matmul dtype), streamed
    t_ref,      # [TB, 1]   precomputed target logit per row (f32)
    o_ref,      # [TB, 1]   per-row loss output (written on last class tile)
    m_sc,       # [TB, 1]   running max (f32)
    l_sc,       # [TB, 1]   running sum-of-exp (f32)
    *,
    two_scale,
    block_c,
    n_valid_last,
    mask_last,
):
    ci = pl.program_id(1)
    nc = pl.num_programs(1)
    neg_big = jnp.float32(-1e30)

    # ---- init accumulators once per batch tile --------------------------------
    @pl.when(ci == 0)
    def _():
        m_sc[...] = jnp.full(m_sc.shape, neg_big, jnp.float32)
        l_sc[...] = jnp.zeros_like(l_sc)

    # ---- logits on the MXU: plain [TB,Dp] x [Dp,TC], f32 accumulation ---------
    # -scale*||xn - pn||^2 == 2*scale*<xn,pn> - scale*(||xn||^2 + ||pn||^2);
    # the constants cancel in log_softmax (proxies/embeddings are normalized).
    logits = jnp.dot(
        xn_ref[...], pT_ref[...], preferred_element_type=jnp.float32
    ) * jnp.float32(two_scale)                               # [TB, TC]

    # ---- online log-sum-exp accumulation --------------------------------------
    def _update(lg):
        m_prev = m_sc[...]
        m_new = jnp.maximum(m_prev, jnp.max(lg, axis=-1, keepdims=True))
        alpha = jnp.exp(m_prev - m_new)
        l_sc[...] = alpha * l_sc[...] + jnp.sum(
            jnp.exp(lg - m_new), axis=-1, keepdims=True)
        m_sc[...] = m_new

    if mask_last:
        # Padded class columns only exist in the LAST class tile.
        @pl.when(ci < nc - 1)
        def _():
            _update(logits)

        @pl.when(ci == nc - 1)
        def _():
            col = lax.broadcasted_iota(jnp.int32, (1, block_c), 1)   # (1, TC)
            _update(jnp.where(col < n_valid_last, logits, neg_big))
    else:
        _update(logits)

    # ---- finalize: per-row NCA loss = lse - logit[target] ---------------------
    @pl.when(ci == nc - 1)
    def _():
        o_ref[...] = m_sc[...] + jnp.log(l_sc[...]) - t_ref[...]


def proxy_nca_loss(
    x, proxy, target, *, scale=10.0, block_b=256, block_c=2048,
    matmul_dtype=jnp.bfloat16,
):
    """Pallas-backed Proxy_NCA forward (ps_mu == 0.0 path).

    x:      [B, D] float embeddings
    proxy:  [C, D] float proxy parameters
    target: [B]    int labels in [0, C)   (out-of-range labels are clipped)
    """
    B, D = x.shape
    C, D2 = proxy.shape
    assert D == D2
    md_bytes = jnp.dtype(matmul_dtype).itemsize

    Dp = _round_up(D, 128)

    # ---- class tile: lane-aligned, double-buffered proxy tiles <= ~16 MiB -----
    proxy_buf_budget = 16 * 1024 * 1024
    tc_cap = max(128, (proxy_buf_budget // (2 * Dp * md_bytes)) // 128 * 128)
    TC = max(128, min(_round_up(block_c, 128), tc_cap, _round_up(C, 128)))
    Cp = _round_up(C, TC)
    ncls = Cp // TC

    # ---- batch tile: sublane-aligned; >= 2 tiles on 2-TensorCore chips --------
    TB = max(8, min(_round_up(block_b, 8), _round_up(B, 8)))
    Bp = _round_up(B, TB)
    nb = Bp // TB
    if _tensorcores_per_chip() >= 2 and nb < 2 and B > 8:
        TB = _round_up(-(-B // 2), 8)
        Bp = _round_up(B, TB)
        nb = Bp // TB

    # ---- wrapper-side plumbing: normalize once, cast, transpose, gather -------
    xn = _l2_normalize(x).astype(matmul_dtype)                   # [B, D]
    pn = _l2_normalize(proxy).astype(matmul_dtype)               # [C, D]
    # Per-row target logit from the SAME normalized/cast values the MXU sees
    # (difference vs. the in-kernel dot is only f32 accumulation order).
    p_t = jnp.take(pn, target.astype(jnp.int32), axis=0)         # [B, D]
    t_row = (2.0 * float(scale)) * jnp.sum(
        xn.astype(jnp.float32) * p_t.astype(jnp.float32), axis=-1, keepdims=True)

    xn_p = jnp.zeros((Bp, Dp), matmul_dtype).at[:B, :D].set(xn)
    pT_p = jnp.zeros((Dp, Cp), matmul_dtype).at[:D, :C].set(pn.T)
    t_p = jnp.zeros((Bp, 1), jnp.float32).at[:B, :].set(t_row)

    mask_last = (Cp != C)
    n_valid_last = C - (ncls - 1) * TC

    kernel = functools.partial(
        _proxy_nca_kernel,
        two_scale=2.0 * float(scale),
        block_c=TC,
        n_valid_last=n_valid_last,
        mask_last=mask_last,
    )

    # ---- explicit scoped-VMEM limit from the actual working set ---------------
    lane = 128
    vmem_ws = (2 * TB * Dp * md_bytes        # xn blocks (double-buffered)
               + 2 * Dp * TC * md_bytes      # proxy blocks (double-buffered)
               + 2 * TB * lane * 4           # t blocks (lane-padded)
               + 2 * TB * lane * 4           # out blocks (lane-padded)
               + 2 * TB * lane * 4)          # m/l scratch
    vmem_limit = int(min(max(vmem_ws * 3 // 2 + (2 << 20), 16 << 20), 64 << 20))

    cost = pl.CostEstimate(
        flops=2 * Bp * Cp * Dp,
        transcendentals=Bp * Cp + Bp,
        bytes_accessed=(Bp * Dp * md_bytes + nb * Cp * Dp * md_bytes + Bp * 8),
    )

    per_row = pl.pallas_call(
        kernel,
        out_shape=jax.ShapeDtypeStruct((Bp, 1), jnp.float32),
        grid_spec=pltpu.PrefetchScalarGridSpec(
            num_scalar_prefetch=0,
            grid=(nb, ncls),                                    # (batch, class-reduction)
            in_specs=[
                pl.BlockSpec((TB, Dp), lambda bi, ci: (bi, 0)),   # xn: resident over ci
                pl.BlockSpec((Dp, TC), lambda bi, ci: (0, ci)),   # pn^T: streamed, double-buffered
                pl.BlockSpec((TB, 1), lambda bi, ci: (bi, 0)),    # target logits
            ],
            out_specs=pl.BlockSpec((TB, 1), lambda bi, ci: (bi, 0)),
            scratch_shapes=[
                pltpu.VMEM((TB, 1), jnp.float32),   # running max
                pltpu.VMEM((TB, 1), jnp.float32),   # running sum-of-exp
            ],
        ),
        compiler_params=pltpu.CompilerParams(
            dimension_semantics=("parallel", "arbitrary"),
            vmem_limit_bytes=vmem_limit,
        ),
        cost_estimate=cost,
    )(xn_p, pT_p, t_p)

    # Mean over the true batch (padded rows excluded); trivial JAX epilogue.
    return jnp.sum(per_row[:B, 0]) / jnp.float32(B)


def kaiming_uniform_proxy(key, n_classes, input_dim):
    """torch.nn.init.kaiming_uniform_(a=sqrt(5)) on [n_classes, input_dim]."""
    gain = math.sqrt(2.0 / (1.0 + 5.0))
    bound = gain * math.sqrt(3.0 / input_dim)
    return jax.random.uniform(
        key, (n_classes, input_dim), dtype=jnp.float32, minval=-bound, maxval=bound
    )


if __name__ == "__main__":
    scale = 10.0
    key = jax.random.PRNGKey(0)
    k_x, k_p, k_t, k_x2, k_p2, k_t2 = jax.random.split(key, 6)

    # Pure-JAX reference of the PyTorch math.
    def ref(x, proxy, target, scale):
        xn = x / jnp.maximum(jnp.linalg.norm(x, axis=1, keepdims=True), 1e-12)
        pn = proxy / jnp.maximum(jnp.linalg.norm(proxy, axis=1, keepdims=True), 1e-12)
        d = jnp.maximum(
            jnp.sum(xn * xn, 1, keepdims=True)
            + jnp.sum(pn * pn, 1, keepdims=True).T
            - 2.0 * xn @ pn.T,
            0.0,
        ) * scale
        log_sm = jax.nn.log_softmax(-d, axis=-1)
        oh = jax.nn.one_hot(target, proxy.shape[0], dtype=jnp.float32)
        return jnp.mean(jnp.sum(-oh * log_sm, -1))

    # --- small deterministic example: batch=8, dim=32, 16 classes --------------
    B, D, C = 8, 32, 16
    x = jax.random.normal(k_x, (B, D), dtype=jnp.float32)
    proxy = kaiming_uniform_proxy(k_p, C, D)
    target = jax.random.randint(k_t, (B,), 0, C, dtype=jnp.int32)
    ref_loss = ref(x, proxy, target, scale)

    loss_f32 = proxy_nca_loss(x, proxy, target, scale=scale, matmul_dtype=jnp.float32)
    jax.block_until_ready(loss_f32)
    assert jnp.allclose(loss_f32, ref_loss, rtol=1e-4, atol=1e-4), (loss_f32, ref_loss)

    loss_bf16 = proxy_nca_loss(x, proxy, target, scale=scale)   # default bf16 MXU path
    jax.block_until_ready(loss_bf16)
    assert jnp.allclose(loss_bf16, ref_loss, rtol=5e-2, atol=5e-2), (loss_bf16, ref_loss)

    # --- multi-tile example: exercises class streaming + tail masking ----------
    B2, D2, C2 = 24, 160, 300
    x2 = jax.random.normal(k_x2, (B2, D2), dtype=jnp.float32)
    proxy2 = kaiming_uniform_proxy(k_p2, C2, D2)
    target2 = jax.random.randint(k_t2, (B2,), 0, C2, dtype=jnp.int32)
    ref_loss2 = ref(x2, proxy2, target2, scale)

    loss2 = proxy_nca_loss(x2, proxy2, target2, scale=scale,
                           block_b=8, block_c=128, matmul_dtype=jnp.float32)
    jax.block_until_ready(loss2)
    assert jnp.allclose(loss2, ref_loss2, rtol=1e-4, atol=1e-4), (loss2, ref_loss2)

    # TODO(synk): proxy_synthesis branch (ps_mu > 0) uses host-side numpy beta
    # sampling and dynamic concat sizes; default ps_mu=0.0 path is implemented.
    print("KERNEL_OK")
</pallas_src>

<mosaic_0001>
module attributes {stable_mosaic.version = 11 : i64} {
  func.func @_proxy_nca_kernel(%arg0: i32, %arg1: i32, %arg2: memref<8x128xf32, #tpu.memory_space<vmem>>, %arg3: memref<128x128xf32, #tpu.memory_space<vmem>>, %arg4: memref<8x1xf32, #tpu.memory_space<vmem>>, %arg5: memref<8x1xf32, #tpu.memory_space<vmem>>, %arg6: memref<8x1xf32, #tpu.memory_space<vmem>>, %arg7: memref<8x1xf32, #tpu.memory_space<vmem>>) attributes {dimension_semantics = [#tpu.dimension_semantics<parallel>, #tpu.dimension_semantics<arbitrary>], iteration_bounds = array<i64: 1, 1>, scalar_prefetch = 0 : i64, scratch_operands = 2 : i64, tpu.core_type = #tpu.core_type<tc>, window_params = [{transform_indices = @transform_0, window_bounds = array<i64: 8, 128>}, {transform_indices = @transform_1, window_bounds = array<i64: 128, 128>}, {transform_indices = @transform_2, window_bounds = array<i64: 8, 1>}, {transform_indices = @transform_3, window_bounds = array<i64: 8, 1>}]} {
    %c0_i32 = arith.constant 0 : i32
    %0 = arith.cmpi eq, %arg1, %c0_i32 : i32
    %1 = arith.extui %0 : i1 to i32
    %cst = arith.constant -1.000000e+30 : f32
    %c0_i32_0 = arith.constant 0 : i32
    %2 = arith.cmpi ne, %1, %c0_i32_0 : i32
    scf.if %2 {
      %17 = vector.broadcast %cst : f32 to vector<8x1xf32>
      %c0_13 = arith.constant 0 : index
      %c0_14 = arith.constant 0 : index
      %18 = vector.load %arg6[%c0_13, %c0_14] : memref<8x1xf32, #tpu.memory_space<vmem>>, vector<8x1xf32>
      tpu.vector_store %arg6[%c0_13, %c0_14], %17 {strides = array<i32>} : memref<8x1xf32, #tpu.memory_space<vmem>>, vector<8x1xf32>,
      %cst_15 = arith.constant 0.000000e+00 : f32
      %19 = vector.broadcast %cst_15 : f32 to vector<8x1xf32>
      %c0_16 = arith.constant 0 : index
      %c0_17 = arith.constant 0 : index
      %20 = vector.load %arg7[%c0_16, %c0_17] : memref<8x1xf32, #tpu.memory_space<vmem>>, vector<8x1xf32>
      tpu.vector_store %arg7[%c0_16, %c0_17], %19 {strides = array<i32>} : memref<8x1xf32, #tpu.memory_space<vmem>>, vector<8x1xf32>,
    } else {
    }
    %c0 = arith.constant 0 : index
    %c0_1 = arith.constant 0 : index
    %3 = vector.load %arg2[%c0, %c0_1] : memref<8x128xf32, #tpu.memory_space<vmem>>, vector<8x128xf32>
    %c0_2 = arith.constant 0 : index
    %c0_3 = arith.constant 0 : index
    %4 = vector.load %arg3[%c0_2, %c0_3] : memref<128x128xf32, #tpu.memory_space<vmem>>, vector<128x128xf32>
    %cst_4 = arith.constant dense<0.000000e+00> : vector<8x128xf32>
    %5 = tpu.matmul %3, %4, %cst_4 {dimension_numbers = #tpu.dot_dimension_numbers<[1], [0], [0], [1], [0, 0, 1, 1], [], []>} : vector<8x128xf32>, vector<128x128xf32>, vector<8x128xf32> -> vector<8x128xf32>
    %cst_5 = arith.constant 2.000000e+01 : f32
    %6 = vector.broadcast %cst_5 : f32 to vector<8x128xf32>
    %7 = arith.mulf %5, %6 : vector<8x128xf32>
    %c0_i32_6 = arith.constant 0 : i32
    %8 = arith.cmpi slt, %arg1, %c0_i32_6 : i32
    %9 = arith.extui %8 : i1 to i32
    %c0_i32_7 = arith.constant 0 : i32
    %10 = arith.cmpi ne, %9, %c0_i32_7 : i32
    scf.if %10 {
      %c0_13 = arith.constant 0 : index
      %c0_14 = arith.constant 0 : index
      %17 = vector.load %arg6[%c0_13, %c0_14] : memref<8x1xf32, #tpu.memory_space<vmem>>, vector<8x1xf32>
      %cst_15 = arith.constant dense<0xFF800000> : vector<8xf32>
      %18 = vector.multi_reduction <maximumf>, %7, %cst_15 [1] : vector<8x128xf32> to vector<8xf32>
      %19 = vector.shape_cast %18 : vector<8xf32> to vector<8x1xf32>
      %20 = arith.maximumf %17, %19 : vector<8x1xf32>
      %21 = arith.subf %17, %20 : vector<8x1xf32>
      %22 = math.exp %21 : vector<8x1xf32>
      %c0_16 = arith.constant 0 : index
      %c0_17 = arith.constant 0 : index
      %23 = vector.load %arg7[%c0_16, %c0_17] : memref<8x1xf32, #tpu.memory_space<vmem>>, vector<8x1xf32>
      %24 = arith.mulf %22, %23 : vector<8x1xf32>
      %25 = vector.broadcast %20 : vector<8x1xf32> to vector<8x128xf32>
      %26 = arith.subf %7, %25 : vector<8x128xf32>
      %27 = math.exp %26 : vector<8x128xf32>
      %cst_18 = arith.constant dense<0.000000e+00> : vector<8xf32>
      %28 = vector.multi_reduction <add>, %27, %cst_18 [1] : vector<8x128xf32> to vector<8xf32>
      %29 = vector.shape_cast %28 : vector<8xf32> to vector<8x1xf32>
      %30 = arith.addf %24, %29 : vector<8x1xf32>
      %c0_19 = arith.constant 0 : index
      %c0_20 = arith.constant 0 : index
      %31 = vector.load %arg7[%c0_19, %c0_20] : memref<8x1xf32, #tpu.memory_space<vmem>>, vector<8x1xf32>
      tpu.vector_store %arg7[%c0_19, %c0_20], %30 {strides = array<i32>} : memref<8x1xf32, #tpu.memory_space<vmem>>, vector<8x1xf32>,
      %c0_21 = arith.constant 0 : index
      %c0_22 = arith.constant 0 : index
      %32 = vector.load %arg6[%c0_21, %c0_22] : memref<8x1xf32, #tpu.memory_space<vmem>>, vector<8x1xf32>
      tpu.vector_store %arg6[%c0_21, %c0_22], %20 {strides = array<i32>} : memref<8x1xf32, #tpu.memory_space<vmem>>, vector<8x1xf32>,
    } else {
    }
    %c0_i32_8 = arith.constant 0 : i32
    %11 = arith.cmpi eq, %arg1, %c0_i32_8 : i32
    %12 = arith.extui %11 : i1 to i32
    %cst_9 = arith.constant -1.000000e+30 : f32
    %c0_i32_10 = arith.constant 0 : i32
    %13 = arith.cmpi ne, %12, %c0_i32_10 : i32
    scf.if %13 {
      %17 = tpu.iota {dimensions = array<i32: 1>} : vector<1x128xi32>
      %c16_i32 = arith.constant 16 : i32
      %18 = vector.broadcast %c16_i32 : i32 to vector<1x128xi32>
      %19 = arith.cmpi slt, %17, %18 : vector<1x128xi32>
      %20 = vector.shape_cast %19 : vector<1x128xi1> to vector<1x128xi1>
      %21 = vector.broadcast %20 : vector<1x128xi1> to vector<8x128xi1>
      %22 = vector.broadcast %cst_9 : f32 to vector<8x128xf32>
      %23 = arith.select %21, %7, %22 : vector<8x128xi1>, vector<8x128xf32>
      %c0_13 = arith.constant 0 : index
      %c0_14 = arith.constant 0 : index
      %24 = vector.load %arg6[%c0_13, %c0_14] : memref<8x1xf32, #tpu.memory_space<vmem>>, vector<8x1xf32>
      %cst_15 = arith.constant dense<0xFF800000> : vector<8xf32>
      %25 = vector.multi_reduction <maximumf>, %23, %cst_15 [1] : vector<8x128xf32> to vector<8xf32>
      %26 = vector.shape_cast %25 : vector<8xf32> to vector<8x1xf32>
      %27 = arith.maximumf %24, %26 : vector<8x1xf32>
      %28 = arith.subf %24, %27 : vector<8x1xf32>
      %29 = math.exp %28 : vector<8x1xf32>
      %c0_16 = arith.constant 0 : index
      %c0_17 = arith.constant 0 : index
      %30 = vector.load %arg7[%c0_16, %c0_17] : memref<8x1xf32, #tpu.memory_space<vmem>>, vector<8x1xf32>
      %31 = arith.mulf %29, %30 : vector<8x1xf32>
      %32 = vector.broadcast %27 : vector<8x1xf32> to vector<8x128xf32>
      %33 = arith.subf %23, %32 : vector<8x128xf32>
      %34 = math.exp %33 : vector<8x128xf32>
      %cst_18 = arith.constant dense<0.000000e+00> : vector<8xf32>
      %35 = vector.multi_reduction <add>, %34, %cst_18 [1] : vector<8x128xf32> to vector<8xf32>
      %36 = vector.shape_cast %35 : vector<8xf32> to vector<8x1xf32>
      %37 = arith.addf %31, %36 : vector<8x1xf32>
      %c0_19 = arith.constant 0 : index
      %c0_20 = arith.constant 0 : index
      %38 = vector.load %arg7[%c0_19, %c0_20] : memref<8x1xf32, #tpu.memory_space<vmem>>, vector<8x1xf32>
      tpu.vector_store %arg7[%c0_19, %c0_20], %37 {strides = array<i32>} : memref<8x1xf32, #tpu.memory_space<vmem>>, vector<8x1xf32>,
      %c0_21 = arith.constant 0 : index
      %c0_22 = arith.constant 0 : index
      %39 = vector.load %arg6[%c0_21, %c0_22] : memref<8x1xf32, #tpu.memory_space<vmem>>, vector<8x1xf32>
      tpu.vector_store %arg6[%c0_21, %c0_22], %27 {strides = array<i32>} : memref<8x1xf32, #tpu.memory_space<vmem>>, vector<8x1xf32>,
    } else {
    }
    %c0_i32_11 = arith.constant 0 : i32
    %14 = arith.cmpi eq, %arg1, %c0_i32_11 : i32
    %15 = arith.extui %14 : i1 to i32
    %c0_i32_12 = arith.constant 0 : i32
    %16 = arith.cmpi ne, %15, %c0_i32_12 : i32
    scf.if %16 {
      %c0_13 = arith.constant 0 : index
      %c0_14 = arith.constant 0 : index
      %17 = vector.load %arg6[%c0_13, %c0_14] : memref<8x1xf32, #tpu.memory_space<vmem>>, vector<8x1xf32>
      %c0_15 = arith.constant 0 : index
      %c0_16 = arith.constant 0 : index
      %18 = vector.load %arg7[%c0_15, %c0_16] : memref<8x1xf32, #tpu.memory_space<vmem>>, vector<8x1xf32>
      %19 = math.log %18 : vector<8x1xf32>
      %20 = arith.addf %17, %19 : vector<8x1xf32>
      %c0_17 = arith.constant 0 : index
      %c0_18 = arith.constant 0 : index
      %21 = vector.load %arg4[%c0_17, %c0_18] : memref<8x1xf32, #tpu.memory_space<vmem>>, vector<8x1xf32>
      %22 = arith.subf %20, %21 : vector<8x1xf32>
      %c0_19 = arith.constant 0 : index
      %c0_20 = arith.constant 0 : index
      %23 = vector.load %arg5[%c0_19, %c0_20] : memref<8x1xf32, #tpu.memory_space<vmem>>, vector<8x1xf32>
      tpu.vector_store %arg5[%c0_19, %c0_20], %22 {strides = array<i32>} : memref<8x1xf32, #tpu.memory_space<vmem>>, vector<8x1xf32>,
    } else {
    }
    return
  }
  func.func @transform_0(%arg0: i32, %arg1: i32) -> (i32, i32) {
    %c0_i32 = arith.constant 0 : i32
    %c0_i32_0 = arith.constant 0 : i32
    return %arg0, %c0_i32 : i32, i32
  }
  func.func @transform_1(%arg0: i32, %arg1: i32) -> (i32, i32) {
    %c0_i32 = arith.constant 0 : i32
    %c0_i32_0 = arith.constant 0 : i32
    return %c0_i32, %arg1 : i32, i32
  }
  func.func @transform_2(%arg0: i32, %arg1: i32) -> (i32, i32) {
    %c0_i32 = arith.constant 0 : i32
    %c0_i32_0 = arith.constant 0 : i32
    return %arg0, %c0_i32 : i32, i32
  }
  func.func @transform_3(%arg0: i32, %arg1: i32) -> (i32, i32) {
    %c0_i32 = arith.constant 0 : i32
    %c0_i32_0 = arith.constant 0 : i32
    return %arg0, %c0_i32 : i32, i32
  }
}

</mosaic_0001>

<llo_original>
// kernel: tpu_custom_call.1
$region0: #{tpu_custom_call.1}
  #allocation0 [shape = 'u32[]', space=smem, size = 0x4, offset = 0x4, fixed_abs, tag = 'smem constant byte address 0x4 - core index']
  #allocation1 [shape = 'u32[144,128]{1,0:T(1,128)}', space=vmem, size = 0x12000, scoped, tag = 'internal scratch']
  #allocation2 [shape = 'f32[8,1]{1,0:T(8,128)}', space=vmem, size = 0x1000, scoped, tag = 'scratch operand']
  #allocation3 [shape = 'f32[8,1]{1,0:T(8,128)}', space=vmem, size = 0x1000, scoped, tag = 'scratch operand']
  %s0 = inlined_call_operand.vmem [shape: f32[8,128], index: 0, kind: input, shape index: {}]
  %s1 = inlined_call_operand.hbm [shape: f32[128,128], index: 1, kind: input, shape index: {}]
  %s2 = inlined_call_operand.vmem [shape: f32[8,1], index: 2, kind: input, shape index: {}]
  %s3 = inlined_call_operand.vmem [shape: f32[8,1], index: 3, kind: output, shape index: {}]
  %s4 = sld [smem:[#allocation0]]
  $region38: #{tpu_custom_call.1} parent=0
    _
  %s6 = ssub.s32 1, %s4
  %s7 = scalar_select 0, %s6, %s4
  $region1: #{tpu_custom_call.1} parent=0
    #allocation4 [shape = 'u8[65536]{0}', space=vmem, size = 0x10000, scoped, tag = 'input window, operand 1, single buffered']
    #allocation5 [shape = 's32[1]{0}', space=sflag, size = 0x4, scoped, tag = 'scoped memory for tpu_custom_call.1']
    %8 = vsyncpa [#allocation5], 0
    // Predicated region
    $region2: #{tpu_custom_call.1} parent=1 // pred_check
      _
    $region3: #{tpu_custom_call.1} parent=1 // pred_check_branch
      %10 = sbr.rel (0) target = $region5
    $region4: #{tpu_custom_call.1} parent=1 // pred_region
      _
    $region5: #{tpu_custom_call.1} parent=1 // pred_fallthru
      _
    // Predicated region
    $region6: #{tpu_custom_call.1} parent=1 // pred_check
      _
    $region7: #{tpu_custom_call.1} parent=1 // pred_check_branch
      %12 = sbr.rel (0) target = $region9
    $region8: #{tpu_custom_call.1} parent=1 // pred_region
      %s14 = ssub.s32 2048, 2048
      %15 = vsyncadd [#allocation5], %s14
      %s16 = sshll.u32 [#allocation4], 4
      %s17 = int_to_ptr.vmem [resolvable:$true] %s16
      %22 = dma.hbm_to_vmem [thread:$0]  %s1, 2048, %s17, [#allocation5], 128, 128, 8
    $region9: #{tpu_custom_call.1} parent=1 // pred_fallthru
      _
    // Predicated region
    $region10: #{tpu_custom_call.1} parent=1 // pred_check
      _
    $region11: #{tpu_custom_call.1} parent=1 // pred_check_branch
      %24 = sbr.rel (0) target = $region13
    $region12: #{tpu_custom_call.1} parent=1 // pred_region
      _
    $region13: #{tpu_custom_call.1} parent=1 // pred_fallthru
      _
    // Predicated region
    $region14: #{tpu_custom_call.1} parent=1 // pred_check
      _
    $region15: #{tpu_custom_call.1} parent=1 // pred_check_branch
      %26 = sbr.rel (0) target = $region17
    $region16: #{tpu_custom_call.1} parent=1 // pred_region
      %27 = dma.done [#allocation5], 2048
    $region17: #{tpu_custom_call.1} parent=1 // pred_fallthru
      _
    %p28 = scmp.eq.s32.totalorder 0, 0
    // Predicated region
    $region18: #{tpu_custom_call.1} parent=1 // pred_check
      %p29 = pneg %p28
    $region19: #{tpu_custom_call.1} parent=1 // pred_check_branch
      %31 = sbr.rel (%p29) target = $region21
    $region20: #{tpu_custom_call.1} parent=1 // pred_region
      %vm32 = vcmask 7168
      %33 = vst.msk [vmem:[#allocation2] sm:$0xff] %vm32, -1e+30
      %34 = vst.msk [vmem:[#allocation3] sm:$0xff] %vm32, 0.0
    $region21: #{tpu_custom_call.1} parent=1 // pred_fallthru
      _
    %v35 = vld [vmem:[%s0] sm:$0xff]
    %v36 = vld [vmem:[#allocation4] sm:$0xff]
    %v37 = vld [vmem:[#allocation4 + $0x8] sm:$0xff]
    %v38 = vld [vmem:[#allocation4 + $0x10] sm:$0xff]
    %v39 = vld [vmem:[#allocation4 + $0x18] sm:$0xff]
    %v40 = vld [vmem:[#allocation4 + $0x20] sm:$0xff]
    %v41 = vld [vmem:[#allocation4 + $0x28] sm:$0xff]
    %v42 = vld [vmem:[#allocation4 + $0x30] sm:$0xff]
    %v43 = vld [vmem:[#allocation4 + $0x38] sm:$0xff]
    %v44 = vld [vmem:[#allocation4 + $0x40] sm:$0xff]
    %v45 = vld [vmem:[#allocation4 + $0x48] sm:$0xff]
    %v46 = vld [vmem:[#allocation4 + $0x50] sm:$0xff]
    %v47 = vld [vmem:[#allocation4 + $0x58] sm:$0xff]
    %v48 = vld [vmem:[#allocation4 + $0x60] sm:$0xff]
    %v49 = vld [vmem:[#allocation4 + $0x68] sm:$0xff]
    %v50 = vld [vmem:[#allocation4 + $0x70] sm:$0xff]
    %v51 = vld [vmem:[#allocation4 + $0x78] sm:$0xff]
    %52 = vmatprep.subr.mxu0 0.0
    %53 = vmatpush1.msra.mxu0 %v36
    %54 = vmatprep.subr.mxu0 0.0
    %55 = vmatpush1.msra.mxu0 %v37
    %56 = vmatprep.subr.mxu0 0.0
    %57 = vmatpush1.msra.mxu0 %v38
    %58 = vmatprep.subr.mxu0 0.0
    %59 = vmatpush1.msra.mxu0 %v39
    %60 = vmatprep.subr.mxu0 0.0
    %61 = vmatpush1.msra.mxu0 %v40
    %62 = vmatprep.subr.mxu0 0.0
    %63 = vmatpush1.msra.mxu0 %v41
    %64 = vmatprep.subr.mxu0 0.0
    %65 = vmatpush1.msra.mxu0 %v42
    %66 = vmatprep.subr.mxu0 0.0
    %67 = vmatpush1.msra.mxu0 %v43
    %68 = vmatprep.subr.mxu0 0.0
    %69 = vmatpush1.msra.mxu0 %v44
    %70 = vmatprep.subr.mxu0 0.0
    %71 = vmatpush1.msra.mxu0 %v45
    %72 = vmatprep.subr.mxu0 0.0
    %73 = vmatpush1.msra.mxu0 %v46
    %74 = vmatprep.subr.mxu0 0.0
    %75 = vmatpush1.msra.mxu0 %v47
    %76 = vmatprep.subr.mxu0 0.0
    %77 = vmatpush1.msra.mxu0 %v48
    %78 = vmatprep.subr.mxu0 0.0
    %79 = vmatpush1.msra.mxu0 %v49
    %80 = vmatprep.subr.mxu0 0.0
    %81 = vmatpush1.msra.mxu0 %v50
    %82 = vmatprep.subr.mxu0 0.0
    %83 = vmatpush1.msra.mxu0 %v51
    %84 = vmatprep.subr.mxu0 0.0
    %85 = vmatpush1.msra.mxu0 0.0
    %86 = vmatprep.subr.mxu0 0.0
    %87 = vmatpush1.msra.mxu0 0.0
    %88 = vmatprep.subr.mxu0 0.0
    %89 = vmatpush1.msra.mxu0 0.0
    %90 = vmatprep.subr.mxu0 0.0
    %91 = vmatpush1.msra.mxu0 0.0
    %92 = vmatprep.subr.mxu0 0.0
    %93 = vmatpush1.msra.mxu0 0.0
    %94 = vmatprep.subr.mxu0 0.0
    %95 = vmatpush1.msra.mxu0 0.0
    %96 = vmatprep.subr.mxu0 0.0
    %97 = vmatpush1.msra.mxu0 0.0
    %98 = vmatprep.subr.mxu0 0.0
    %99 = vmatpush1.msra.mxu0 0.0
    %100 = vmatprep.subr.mxu0 0.0
    %101 = vmatpush1.msra.mxu0 0.0
    %102 = vmatprep.subr.mxu0 0.0
    %103 = vmatpush1.msra.mxu0 0.0
    %104 = vmatprep.subr.mxu0 0.0
    %105 = vmatpush1.msra.mxu0 0.0
    %106 = vmatprep.subr.mxu0 0.0
    %107 = vmatpush1.msra.mxu0 0.0
    %108 = vmatprep.subr.mxu0 0.0
    %109 = vmatpush1.msra.mxu0 0.0
    %110 = vmatprep.subr.mxu0 0.0
    %111 = vmatpush1.msra.mxu0 0.0
    %112 = vmatprep.subr.mxu0 0.0
    %113 = vmatpush1.msra.mxu0 0.0
    %114 = vmatprep.subr.mxu0 0.0
    %115 = vmatpush1.msra.mxu0 0.0
    %116 = vmatprep.mubr.f32.mxu0 0.0
    %117 = vmatmul.mubr.f32.gmra.mrb[0].mxu0 %v35
    %v118 = vpop.f32.mrb[0].mxu0
    %v119 = vadd.f32 0.0, %v118
    %v120 = vpop.f32.mrb[0].mxu0
    %121 = vdwg.mxu0
    %v122 = vmul.f32 %v119, 20.0
    %p123 = scmp.lt.s32.totalorder 0, 0
    // Predicated region
    $region22: #{tpu_custom_call.1} parent=1 // pred_check
      %p124 = pneg %p123
    $region23: #{tpu_custom_call.1} parent=1 // pred_check_branch
      %126 = sbr.rel (%p124) target = $region25
    $region24: #{tpu_custom_call.1} parent=1 // pred_region
      %v127 = vld [vmem:[#allocation2] sm:$0xff]
      %128 = vmax.xlane.f32.xlu0 %v122
      %v129 = vpop.xlane.xlu0 %128
      %v130 = vmax.f32 %v127, %v129
      %v131 = vsub.f32 %v127, %v130
      %v132 = vmul.f32 %v131, 1.442695
      %v133 = vpow.pop %v132
      %v134 = vld [vmem:[#allocation3] sm:$0xff]
      %v135 = vmul.f32 %v133, %v134
      %137 = vset.pattern.permute.xlu0 0
      %138 = vperm.xlu0 %137, %v130
      %v139 = vpop.permute.xlu0 %138
      %v141 = vsub.f32 %v122, %v139
      %v142 = vmul.f32 %v141, 1.442695
      %v143 = vpow.pop %v142
      %144 = vadd.xlane.f32.xlu0 %v143
      %v145 = vpop.xlane.xlu0 %144
      %v146 = vadd.f32 %v135, %v145
      %vm147 = vcmask 7168
      %148 = vst.msk [vmem:[#allocation3] sm:$0xff] %vm147, %v146
      %149 = vst.msk [vmem:[#allocation2] sm:$0xff] %vm147, %v130
    $region25: #{tpu_custom_call.1} parent=1 // pred_fallthru
      _
    // Predicated region
    $region26: #{tpu_custom_call.1} parent=1 // pred_check
      %p150 = pneg %p28
    $region27: #{tpu_custom_call.1} parent=1 // pred_check_branch
      %152 = sbr.rel (%p150) target = $region29
    $region28: #{tpu_custom_call.1} parent=1 // pred_region
      %v153 = vlaneseq
      %v154 = vand.u32 %v153, 127
      %vm155 = vcmp.lt.s32.totalorder %v154, 16
      %v156 = vsel %vm155, 1, 0
      %vm157 = vcmp.eq.s32.totalorder %v156, 1
      %v158 = vsel %vm157, %v122, -1e+30
      %v159 = vld [vmem:[#allocation2] sm:$0xff]
      %160 = vmax.xlane.f32.xlu0 %v158
      %v161 = vpop.xlane.xlu0 %160
      %v162 = vmax.f32 %v159, %v161
      %v163 = vsub.f32 %v159, %v162
      %v164 = vmul.f32 %v163, 1.442695
      %v165 = vpow.pop %v164
      %v166 = vld [vmem:[#allocation3] sm:$0xff]
      %v167 = vmul.f32 %v165, %v166
      %169 = vset.pattern.permute.xlu0 0
      %170 = vperm.xlu0 %169, %v162
      %v171 = vpop.permute.xlu0 %170
      %v173 = vsub.f32 %v158, %v171
      %v174 = vmul.f32 %v173, 1.442695
      %v175 = vpow.pop %v174
      %176 = vadd.xlane.f32.xlu0 %v175
      %v177 = vpop.xlane.xlu0 %176
      %v178 = vadd.f32 %v167, %v177
      %vm179 = vcmask 7168
      %180 = vst.msk [vmem:[#allocation3] sm:$0xff] %vm179, %v178
      %181 = vst.msk [vmem:[#allocation2] sm:$0xff] %vm179, %v162
      %v182 = vld [vmem:[#allocation2] sm:$0xff]
      %v183 = vld [vmem:[#allocation3] sm:$0xff]
      %v184 = vlog2.pop %v183
      %v185 = vmul.f32 %v184, 0.6931472
      %v186 = vadd.f32 %v182, %v185
      %v187 = vld [vmem:[%s2] sm:$0xff]
      %v188 = vsub.f32 %v186, %v187
      %189 = vst.msk [vmem:[%s3] sm:$0xff] %vm179, %v188
    $region29: #{tpu_custom_call.1} parent=1 // pred_fallthru
      _
    // Predicated region
    $region30: #{tpu_custom_call.1} parent=1 // pred_check
      _
    $region31: #{tpu_custom_call.1} parent=1 // pred_check_branch
      %191 = sbr.rel (0) target = $region33
    $region32: #{tpu_custom_call.1} parent=1 // pred_region
      _
    $region33: #{tpu_custom_call.1} parent=1 // pred_fallthru
      _
    // Predicated region
    $region34: #{tpu_custom_call.1} parent=1 // pred_check
      _
    $region35: #{tpu_custom_call.1} parent=1 // pred_check_branch
      %193 = sbr.rel (0) target = $region37
    $region36: #{tpu_custom_call.1} parent=1 // pred_region
      _
    $region37: #{tpu_custom_call.1} parent=1 // pred_fallthru
      _
    %194 = vsyncpa [#allocation5], 1

</llo_original>
